<compile_context>
chip_gen: v7x
topology: tpu7x:2x2x1
jax: 0.10.0
libtpu: 0.0.40
codegen_flags: <defaults>
</compile_context>

<pallas_src>
import functools

import jax
import jax.numpy as jnp
from jax.experimental import pallas as pl
from jax.experimental.pallas import tpu as pltpu


# Sublane packing (rows per (sublane,128) tile) by element size in bytes.
_SUBLANE_BY_ITEMSIZE = {4: 8, 2: 16, 1: 32}


def _concat_dma_kernel(chunk_plan, n_inputs, *refs):
    """Issue one HBM->HBM DMA per chunk into its batch slice of the output.

    refs = (in_hbm_0, ..., in_hbm_{n_inputs-1}, out_hbm, sem)

    chunk_plan: static tuple of (src_idx, src_row_off, dst_row_off, rows).
    All DMAs are started first (concurrently in flight), then waited on.
    No data is staged through VMEM and no vector load/store slots are used.
    """
    in_refs = refs[:n_inputs]
    out_ref = refs[n_inputs]
    sem = refs[n_inputs + 1]

    copies = []
    for ci, (src_idx, src_off, dst_off, rows) in enumerate(chunk_plan):
        cp = pltpu.make_async_copy(
            in_refs[src_idx].at[pl.ds(src_off, rows), :],
            out_ref.at[pl.ds(dst_off, rows), :],
            sem.at[ci],
        )
        cp.start()
        copies.append(cp)

    # All chunks are now in flight concurrently; block on completion.
    for cp in copies:
        cp.wait()


def _device_max_chunks_per_source():
    """Per-chip DMA chunking cap: v5e saturates with a couple of descriptors,
    v7x needs many more in-flight descriptors to reach its 3.2 TB/s HBM."""
    try:
        kind = jax.devices()[0].device_kind.lower()
    except Exception:
        return 4
    if "v5" in kind:
        return 2
    if "v7" in kind:
        return 8
    return 4  # v6e / default


def _plan_chunks(row_counts, sublane, lanes, itemsize,
                 min_chunk_bytes, max_chunks_per_source):
    """Static chunk plan: (src_idx, src_row_off, dst_row_off, rows) per chunk.

    Chunk row counts are rounded to sublane multiples so chunk boundaries stay
    tile-aligned (unmasked descriptors) whenever the source itself is aligned.
    """
    plan = []
    dst_off = 0
    for src_idx, rows_total in enumerate(row_counts):
        nbytes = rows_total * lanes * itemsize
        n_chunks = max(1, min(
            max_chunks_per_source,
            nbytes // max(1, min_chunk_bytes),
            max(1, rows_total // sublane),
        ))
        chunk_rows = -(-rows_total // n_chunks)                # ceil
        chunk_rows = -(-chunk_rows // sublane) * sublane       # round up to sublane
        src_off = 0
        while src_off < rows_total:
            rows = min(chunk_rows, rows_total - src_off)
            plan.append((src_idx, src_off, dst_off + src_off, rows))
            src_off += rows
        dst_off += rows_total
    return tuple(plan)


def receive_samples_forward(recv_tensors, x, *, min_chunk_bytes=512 * 1024,
                            max_chunks_per_source=None):
    """Pallas equivalent of ReceiveSamplesFunc.forward.

    recv_tensors: list of arrays (the 'received' samples), each (N_i, C, H, W)
    x:            local activation, (N_x, C, H, W) (may be None / have N_x == 0)
    returns:      concat([recv_0, ..., recv_{k-1}, x], axis=0)
    """
    # Filter zero-row sources (both received tensors and x).
    tensors = [t for t in recv_tensors if int(t.shape[0]) > 0]
    if x is not None and int(x.shape[0]) > 0:
        tensors.append(x)
    if not tensors:
        raise ValueError("nothing to concatenate (empty recvList and empty x)")

    c, h, w = tensors[0].shape[1:]
    feat = c * h * w
    dtype = tensors[0].dtype
    for t in tensors:
        if tuple(t.shape[1:]) != (c, h, w) or t.dtype != dtype:
            raise ValueError("all concatenated tensors must share dtype and (C,H,W)")

    itemsize = jnp.dtype(dtype).itemsize
    sublane = _SUBLANE_BY_ITEMSIZE.get(itemsize, 8)

    # Lane-dense, tile-friendly flattening:
    #   feat % 128 == 0  -> (N_i * feat/128, 128): every sample is an integer
    #                       number of 128-lane rows, so destination offsets are
    #                       tile-aligned for arbitrary N_i (no reliance on
    #                       N_i % 8 == 0 and no dtype-specific caveat);
    #   otherwise        -> (N_i, feat): still correct, edge lanes masked.
    if feat % 128 == 0:
        rows_per_sample, lanes = feat // 128, 128
    else:
        rows_per_sample, lanes = 1, feat

    flat = [t.reshape(int(t.shape[0]) * rows_per_sample, lanes) for t in tensors]
    row_counts = tuple(int(f.shape[0]) for f in flat)
    total_rows = sum(row_counts)
    total_n = total_rows // rows_per_sample

    if max_chunks_per_source is None:
        max_chunks_per_source = _device_max_chunks_per_source()

    chunk_plan = _plan_chunks(row_counts, sublane, lanes, itemsize,
                              min_chunk_bytes, max_chunks_per_source)

    total_bytes = total_rows * lanes * itemsize

    out_flat = pl.pallas_call(
        functools.partial(_concat_dma_kernel, chunk_plan, len(flat)),
        out_shape=jax.ShapeDtypeStruct((total_rows, lanes), dtype),
        # Everything stays in HBM; the kernel drives the DMAs itself.
        in_specs=[pl.BlockSpec(memory_space=pl.ANY) for _ in flat],
        out_specs=pl.BlockSpec(memory_space=pl.ANY),
        scratch_shapes=[pltpu.SemaphoreType.DMA((len(chunk_plan),))],
        # Pure memory traffic: read + write every byte once.
        cost_estimate=pl.CostEstimate(
            flops=0, transcendentals=0, bytes_accessed=2 * total_bytes),
    )(*flat)

    return out_flat.reshape(total_n, c, h, w)


if __name__ == "__main__":
    key = jax.random.PRNGKey(0)
    k0, k1, kx = jax.random.split(key, 3)

    C, H, W = 4, 16, 16  # feat = 1024 (multiple of 128)

    # Deliberately non-multiple-of-8 per-source batches: the (N*feat/128, 128)
    # flattening keeps every destination offset tile-aligned anyway.
    recv0 = jax.random.normal(k0, (3, C, H, W), dtype=jnp.float32)
    recv1 = jax.random.normal(k1, (5, C, H, W), dtype=jnp.float32)
    recv_empty = jnp.zeros((0, C, H, W), dtype=jnp.float32)  # filtered out
    x = jax.random.normal(kx, (2, C, H, W), dtype=jnp.float32)

    out = receive_samples_forward([recv0, recv_empty, recv1], x)
    out = jax.block_until_ready(out)

    # Reference check against the PyTorch forward's concat semantics.
    ref = jnp.concatenate([recv0, recv_empty, recv1, x], axis=0)
    assert out.shape == (10, C, H, W)
    assert jnp.array_equal(out, ref)

    print("KERNEL_OK")
</pallas_src>

<mosaic_0001>
module attributes {stable_mosaic.version = 11 : i64} {
  func.func @_concat_dma_kernel(%arg0: memref<24x128xf32, #tpu.memory_space<any>>, %arg1: memref<40x128xf32, #tpu.memory_space<any>>, %arg2: memref<16x128xf32, #tpu.memory_space<any>>, %arg3: memref<80x128xf32, #tpu.memory_space<any>>, %arg4: memref<3x!tpu.dma_semaphore, #tpu.memory_space<semaphore_mem>>) attributes {dimension_semantics = [], scalar_prefetch = 0 : i64, scratch_operands = 1 : i64, tpu.core_type = #tpu.core_type<tc>} {
    %c0_i32 = arith.constant 0 : i32
    %c0_i32_0 = arith.constant 0 : i32
    %c0_i32_1 = arith.constant 0 : i32
    %0 = tpu.memref_slice %arg0[%c0_i32_0, %c0_i32_1] : memref<24x128xf32, #tpu.memory_space<any>> -> memref<24x128xf32, #tpu.memory_space<any>>
    %c0_i32_2 = arith.constant 0 : i32
    %c0_i32_3 = arith.constant 0 : i32
    %1 = tpu.memref_slice %arg3[%c0_i32_2, %c0_i32_3] : memref<80x128xf32, #tpu.memory_space<any>> -> memref<24x128xf32, #tpu.memory_space<any>>
    %2 = tpu.memref_slice %arg4[%c0_i32] : memref<3x!tpu.dma_semaphore, #tpu.memory_space<semaphore_mem>> -> memref<1x!tpu.dma_semaphore, #tpu.memory_space<semaphore_mem>>
    %3 = tpu.memref_squeeze %2 : memref<1x!tpu.dma_semaphore, #tpu.memory_space<semaphore_mem>> -> memref<!tpu.dma_semaphore, #tpu.memory_space<semaphore_mem>>
    tpu.enqueue_dma source(%0 : memref<24x128xf32, #tpu.memory_space<any>>) target(%1 : memref<24x128xf32, #tpu.memory_space<any>>) target_semaphore(%3 : memref<!tpu.dma_semaphore, #tpu.memory_space<semaphore_mem>>)
    %c1_i32 = arith.constant 1 : i32
    %c0_i32_4 = arith.constant 0 : i32
    %c0_i32_5 = arith.constant 0 : i32
    %4 = tpu.memref_slice %arg1[%c0_i32_4, %c0_i32_5] : memref<40x128xf32, #tpu.memory_space<any>> -> memref<40x128xf32, #tpu.memory_space<any>>
    %c24_i32 = arith.constant 24 : i32
    %c0_i32_6 = arith.constant 0 : i32
    %5 = tpu.memref_slice %arg3[%c24_i32, %c0_i32_6] : memref<80x128xf32, #tpu.memory_space<any>> -> memref<40x128xf32, #tpu.memory_space<any>>
    %6 = tpu.memref_slice %arg4[%c1_i32] : memref<3x!tpu.dma_semaphore, #tpu.memory_space<semaphore_mem>> -> memref<1x!tpu.dma_semaphore, #tpu.memory_space<semaphore_mem>>
    %7 = tpu.memref_squeeze %6 : memref<1x!tpu.dma_semaphore, #tpu.memory_space<semaphore_mem>> -> memref<!tpu.dma_semaphore, #tpu.memory_space<semaphore_mem>>
    tpu.enqueue_dma source(%4 : memref<40x128xf32, #tpu.memory_space<any>>) target(%5 : memref<40x128xf32, #tpu.memory_space<any>>) target_semaphore(%7 : memref<!tpu.dma_semaphore, #tpu.memory_space<semaphore_mem>>)
    %c2_i32 = arith.constant 2 : i32
    %c0_i32_7 = arith.constant 0 : i32
    %c0_i32_8 = arith.constant 0 : i32
    %8 = tpu.memref_slice %arg2[%c0_i32_7, %c0_i32_8] : memref<16x128xf32, #tpu.memory_space<any>> -> memref<16x128xf32, #tpu.memory_space<any>>
    %c64_i32 = arith.constant 64 : i32
    %c0_i32_9 = arith.constant 0 : i32
    %9 = tpu.memref_slice %arg3[%c64_i32, %c0_i32_9] : memref<80x128xf32, #tpu.memory_space<any>> -> memref<16x128xf32, #tpu.memory_space<any>>
    %10 = tpu.memref_slice %arg4[%c2_i32] : memref<3x!tpu.dma_semaphore, #tpu.memory_space<semaphore_mem>> -> memref<1x!tpu.dma_semaphore, #tpu.memory_space<semaphore_mem>>
    %11 = tpu.memref_squeeze %10 : memref<1x!tpu.dma_semaphore, #tpu.memory_space<semaphore_mem>> -> memref<!tpu.dma_semaphore, #tpu.memory_space<semaphore_mem>>
    tpu.enqueue_dma source(%8 : memref<16x128xf32, #tpu.memory_space<any>>) target(%9 : memref<16x128xf32, #tpu.memory_space<any>>) target_semaphore(%11 : memref<!tpu.dma_semaphore, #tpu.memory_space<semaphore_mem>>)
    %c0_i32_10 = arith.constant 0 : i32
    %c0_i32_11 = arith.constant 0 : i32
    %c0_i32_12 = arith.constant 0 : i32
    %12 = tpu.memref_slice %arg0[%c0_i32_11, %c0_i32_12] : memref<24x128xf32, #tpu.memory_space<any>> -> memref<24x128xf32, #tpu.memory_space<any>>
    %c0_i32_13 = arith.constant 0 : i32
    %c0_i32_14 = arith.constant 0 : i32
    %13 = tpu.memref_slice %arg3[%c0_i32_13, %c0_i32_14] : memref<80x128xf32, #tpu.memory_space<any>> -> memref<24x128xf32, #tpu.memory_space<any>>
    %14 = tpu.memref_slice %arg4[%c0_i32_10] : memref<3x!tpu.dma_semaphore, #tpu.memory_space<semaphore_mem>> -> memref<1x!tpu.dma_semaphore, #tpu.memory_space<semaphore_mem>>
    %15 = tpu.memref_squeeze %14 : memref<1x!tpu.dma_semaphore, #tpu.memory_space<semaphore_mem>> -> memref<!tpu.dma_semaphore, #tpu.memory_space<semaphore_mem>>
    tpu.wait_dma2 semaphore(%15 : memref<!tpu.dma_semaphore, #tpu.memory_space<semaphore_mem>>) src(%12 : memref<24x128xf32, #tpu.memory_space<any>>) dst(%13 : memref<24x128xf32, #tpu.memory_space<any>>)
    %c1_i32_15 = arith.constant 1 : i32
    %c0_i32_16 = arith.constant 0 : i32
    %c0_i32_17 = arith.constant 0 : i32
    %16 = tpu.memref_slice %arg1[%c0_i32_16, %c0_i32_17] : memref<40x128xf32, #tpu.memory_space<any>> -> memref<40x128xf32, #tpu.memory_space<any>>
    %c24_i32_18 = arith.constant 24 : i32
    %c0_i32_19 = arith.constant 0 : i32
    %17 = tpu.memref_slice %arg3[%c24_i32_18, %c0_i32_19] : memref<80x128xf32, #tpu.memory_space<any>> -> memref<40x128xf32, #tpu.memory_space<any>>
    %18 = tpu.memref_slice %arg4[%c1_i32_15] : memref<3x!tpu.dma_semaphore, #tpu.memory_space<semaphore_mem>> -> memref<1x!tpu.dma_semaphore, #tpu.memory_space<semaphore_mem>>
    %19 = tpu.memref_squeeze %18 : memref<1x!tpu.dma_semaphore, #tpu.memory_space<semaphore_mem>> -> memref<!tpu.dma_semaphore, #tpu.memory_space<semaphore_mem>>
    tpu.wait_dma2 semaphore(%19 : memref<!tpu.dma_semaphore, #tpu.memory_space<semaphore_mem>>) src(%16 : memref<40x128xf32, #tpu.memory_space<any>>) dst(%17 : memref<40x128xf32, #tpu.memory_space<any>>)
    %c2_i32_20 = arith.constant 2 : i32
    %c0_i32_21 = arith.constant 0 : i32
    %c0_i32_22 = arith.constant 0 : i32
    %20 = tpu.memref_slice %arg2[%c0_i32_21, %c0_i32_22] : memref<16x128xf32, #tpu.memory_space<any>> -> memref<16x128xf32, #tpu.memory_space<any>>
    %c64_i32_23 = arith.constant 64 : i32
    %c0_i32_24 = arith.constant 0 : i32
    %21 = tpu.memref_slice %arg3[%c64_i32_23, %c0_i32_24] : memref<80x128xf32, #tpu.memory_space<any>> -> memref<16x128xf32, #tpu.memory_space<any>>
    %22 = tpu.memref_slice %arg4[%c2_i32_20] : memref<3x!tpu.dma_semaphore, #tpu.memory_space<semaphore_mem>> -> memref<1x!tpu.dma_semaphore, #tpu.memory_space<semaphore_mem>>
    %23 = tpu.memref_squeeze %22 : memref<1x!tpu.dma_semaphore, #tpu.memory_space<semaphore_mem>> -> memref<!tpu.dma_semaphore, #tpu.memory_space<semaphore_mem>>
    tpu.wait_dma2 semaphore(%23 : memref<!tpu.dma_semaphore, #tpu.memory_space<semaphore_mem>>) src(%20 : memref<16x128xf32, #tpu.memory_space<any>>) dst(%21 : memref<16x128xf32, #tpu.memory_space<any>>)
    return
  }
}

</mosaic_0001>

<llo_original>
// kernel: tpu_custom_call.1
$region0: #{tpu_custom_call.1}
  #allocation0 [shape = 'u32[]', space=smem, size = 0x4, offset = 0x4, fixed_abs, tag = 'smem constant byte address 0x4 - core index']
  #allocation1 [shape = 'u32[144,128]{1,0:T(1,128)}', space=vmem, size = 0x12000, scoped, tag = 'internal scratch']
  #allocation2 [shape = 's32[3]{0}', space=sflag, size = 0xc, scoped, tag = 'scratch operand']
  #allocation3 [shape = 's32[]', space=sflag, size = 0x4, offset = 0, fixed_abs, tag = 'sflag constant byte address 0x0 - dummy sync flag']
  #allocation4 [shape = 'u32[0]{0}', space=smem, size = 0, offset = 0, fixed_abs, tag = 'smem constant byte address 0x0 - null']
  #allocation5 [shape = 's32[]', space=sflag, size = 0x4, offset = 0, fixed_abs, tag = 'sflag constant byte address 0x0 - dummy sync flag']
  #allocation6 [shape = 'u32[0]{0}', space=smem, size = 0, offset = 0, fixed_abs, tag = 'smem constant byte address 0x0 - null']
  #allocation7 [shape = 's32[]', space=sflag, size = 0x4, offset = 0, fixed_abs, tag = 'sflag constant byte address 0x0 - dummy sync flag']
  #allocation8 [shape = 'u32[0]{0}', space=smem, size = 0, offset = 0, fixed_abs, tag = 'smem constant byte address 0x0 - null']
  %s0 = inlined_call_operand.hbm [shape: f32[24,128], index: 0, kind: input, shape index: {}]
  %s1 = inlined_call_operand.hbm [shape: f32[40,128], index: 1, kind: input, shape index: {}]
  %s2 = inlined_call_operand.hbm [shape: f32[16,128], index: 2, kind: input, shape index: {}]
  %s3 = inlined_call_operand.hbm [shape: f32[80,128], index: 3, kind: output, shape index: {}]
  %s4 = sld [smem:[#allocation0]]
  $region2: #{tpu_custom_call.1} parent=0
    _
  %s6 = ssub.s32 1, %s4
  %s7 = scalar_select 0, %s6, %s4
  %s9 = sshll.u32 1, 14
  %s10 = sxor.u32 4294967295, %s9
  %s13 = sshll.u32 3, 24
  %s14 = sxor.u32 4294967295, %s13
  %s15 = sand.u32 0, %s14
  %s17 = sor.u32 %s15, 0
  %20 = dma.general %s0, 384, %s3, [#allocation2], [#allocation3], [#allocation4], %s17, 0
  %s21 = scalar_lea.hbm %s3, 384
  %s22 = scalar_lea.sflag [#allocation2], 1
  %s24 = sshll.u32 1, 14
  %s25 = sxor.u32 4294967295, %s24
  %s28 = sshll.u32 3, 24
  %s29 = sxor.u32 4294967295, %s28
  %s30 = sand.u32 0, %s29
  %s32 = sor.u32 %s30, 0
  %35 = dma.general %s1, 640, %s21, %s22, [#allocation5], [#allocation6], %s32, 0
  %s36 = scalar_lea.hbm %s3, 1024
  %s37 = scalar_lea.sflag [#allocation2], 2
  %s39 = sshll.u32 1, 14
  %s40 = sxor.u32 4294967295, %s39
  %s43 = sshll.u32 3, 24
  %s44 = sxor.u32 4294967295, %s43
  %s45 = sand.u32 0, %s44
  %s47 = sor.u32 %s45, 0
  %50 = dma.general %s2, 256, %s36, %s37, [#allocation7], [#allocation8], %s47, 0
  %s51 = smul.u32 24, 1
  %s52 = sshll.u32 %s51, 4
  %53 = dma.done [#allocation2], %s52
  %s54 = smul.u32 40, 1
  %s55 = sshll.u32 %s54, 4
  %56 = dma.done %s22, %s55
  %s57 = smul.u32 16, 1
  %s58 = sshll.u32 %s57, 4
  %59 = dma.done %s37, %s58
  %60 = vsyncmov [#allocation2]
  %s61 = vpop.sfrf %60
  %p62 = scmp.eq.s32.totalorder %s61, 0
  %p63 = pneg %p62
  %65 = shalt.err (%p63)
  %s66 = scalar_lea.sflag [#allocation2], 1
  %67 = vsyncmov %s66
  %s68 = vpop.sfrf %67
  %p69 = scmp.eq.s32.totalorder %s68, 0
  %p70 = pneg %p69
  %72 = shalt.err (%p70)
  %s73 = scalar_lea.sflag [#allocation2], 2
  %74 = vsyncmov %s73
  %s75 = vpop.sfrf %74
  %p76 = scmp.eq.s32.totalorder %s75, 0
  %p77 = pneg %p76
  %79 = shalt.err (%p77)

</llo_original>
